<compile_context>
chip_gen: v7x
topology: tpu7x:2x2x1
jax: 0.10.0
libtpu: 0.0.40
codegen_flags: <defaults>
</compile_context>

<pallas_src>
import math

import jax
import jax.numpy as jnp
from jax.experimental import pallas as pl
from jax.experimental.pallas import tpu as pltpu

LANE = 128                  # lane width: every feature dim is padded to this
BIAS_ROWS = 8               # bias stored in an 8-row (sublane-aligned) slab, row 0 used
P_ROWS = LANE + BIAS_ROWS   # 136 rows per packed layer block
N_LAYERS = 3
MAX_ROW_TILE = 256          # batch rows per grid step for large batches


def mlp_kernel(x_ref, p_ref, o_ref):
    """fc1 -> relu -> fc2 -> relu -> fc3, all lane-padded to 128.

    x_ref: (row_tile, 128)     padded observation block
    p_ref: (3, 136, 128)       packed [W (128x128); b (8x128)] per layer
    o_ref: (row_tile, 128)     padded output block
    """
    h = x_ref[...]
    for layer in range(N_LAYERS):                 # static unrolled (3 layers)
        w = p_ref[layer, 0:LANE, :]               # (128, 128) static view
        b = p_ref[layer, LANE:LANE + 1, :]        # (1, 128)   static view
        h = jnp.dot(h, w, preferred_element_type=jnp.float32) + b
        if layer < N_LAYERS - 1:                  # no activation on fc3
            h = jnp.maximum(h, 0.0)
    o_ref[...] = h.astype(o_ref.dtype)


def _round_up(n, m):
    return m * ((n + m - 1) // m)


def _pad2d(a, rows, cols):
    out = jnp.zeros((rows, cols), a.dtype)
    return out.at[: a.shape[0], : a.shape[1]].set(a)


def pack_params(params):
    """Pack w1/b1/w2/b2/w3/b3 into one (3, 136, 128) float32 buffer.

    Requires every feature dim <= 128 (true for the walker net 24/64/32/4).
    Zero padding keeps padded lanes exactly zero through all layers.
    """
    blocks = []
    for wk, bk in (("w1", "b1"), ("w2", "b2"), ("w3", "b3")):
        w, b = params[wk], params[bk]
        assert w.shape[0] <= LANE and w.shape[1] <= LANE, "dims must be <= 128"
        wp = _pad2d(w.astype(jnp.float32), LANE, LANE)                      # (128,128)
        bp = _pad2d(b.reshape(1, -1).astype(jnp.float32), BIAS_ROWS, LANE)  # (8,128)
        blocks.append(jnp.concatenate([wp, bp], axis=0))                    # (136,128)
    return jnp.stack(blocks, axis=0)                                        # (3,136,128)


def generic_network_forward(x, packed_params, n_actions):
    """Pallas forward pass of GenericNetwork.

    x:             (B, input_dim) float32   (input_dim <= 128)
    packed_params: (3, 136, 128)  float32   from pack_params()
    returns:       (B, n_actions) float32
    """
    B, D = x.shape
    assert D <= LANE

    # Adaptive batch-row tile: small batches -> tight (multiple-of-8) tile,
    # large batches -> 256-row blocks to amortize per-grid-step overhead.
    row_tile = min(MAX_ROW_TILE, _round_up(B, 8))
    b_pad = _round_up(B, row_tile)
    x_pad = jnp.zeros((b_pad, LANE), jnp.float32).at[:B, :D].set(x)

    out = pl.pallas_call(
        mlp_kernel,
        out_shape=jax.ShapeDtypeStruct((b_pad, LANE), jnp.float32),
        grid_spec=pltpu.PrefetchScalarGridSpec(
            num_scalar_prefetch=0,
            grid=(b_pad // row_tile,),
            in_specs=[
                # batch block marches with the grid
                pl.BlockSpec((row_tile, LANE), lambda i: (i, 0)),
                # packed params: constant index -> stays resident in VMEM
                pl.BlockSpec((N_LAYERS, P_ROWS, LANE), lambda i: (0, 0, 0)),
            ],
            out_specs=pl.BlockSpec((row_tile, LANE), lambda i: (i, 0)),
        ),
        compiler_params=pltpu.CompilerParams(
            dimension_semantics=("parallel",),   # megacore sharding on v7x
            vmem_limit_bytes=8 * 1024 * 1024,    # working set ~1 MB; plenty
        ),
    )(x_pad, packed_params)

    return out[:B, :n_actions]


def init_params(key, input_dim, fc1_dims, fc2_dims, n_actions):
    """Deterministic init mimicking nn.Linear's U(-1/sqrt(fan_in), +)."""
    ks = jax.random.split(key, 6)

    def layer(kw, kb, fan_in, fan_out):
        bound = 1.0 / math.sqrt(fan_in)
        w = jax.random.uniform(kw, (fan_in, fan_out), jnp.float32, -bound, bound)
        b = jax.random.uniform(kb, (1, fan_out), jnp.float32, -bound, bound)
        return w, b

    w1, b1 = layer(ks[0], ks[1], input_dim, fc1_dims)
    w2, b2 = layer(ks[2], ks[3], fc1_dims, fc2_dims)
    w3, b3 = layer(ks[4], ks[5], fc2_dims, n_actions)
    return dict(w1=w1, b1=b1, w2=w2, b2=b2, w3=w3, b3=b3)


def reference_forward(x, p):
    h1 = jax.nn.relu(x @ p["w1"] + p["b1"])
    h2 = jax.nn.relu(h1 @ p["w2"] + p["b2"])
    return h2 @ p["w3"] + p["b3"]


if __name__ == "__main__":
    # BipedalWalker-style network: input_dims=(24,), fc1=64, fc2=32, n_actions=4.
    # Small batch of 32 observations (single tight 32-row grid block).
    B, D, F1, F2, A = 32, 24, 64, 32, 4

    key = jax.random.PRNGKey(0)
    k_x, k_p = jax.random.split(key)
    x = jax.random.normal(k_x, (B, D), dtype=jnp.float32)
    params = init_params(k_p, D, F1, F2, A)

    # Pack + pad weights once (outside the hot path; frozen weights stay
    # on-device as a single contiguous buffer across calls).
    packed = jax.block_until_ready(pack_params(params))
    # TODO(synk): for per-step RL inference, a cross-call VMEM-resident weight
    # prefetch (P10) would remove even this single 209 KB weight DMA per call.

    out = generic_network_forward(x, packed, A)
    out = jax.block_until_ready(out)

    ref = reference_forward(x, params)
    assert out.shape == (B, A)
    assert jnp.allclose(out, ref, atol=1e-4, rtol=1e-4)

    print("KERNEL_OK")
</pallas_src>

<mosaic_0001>
module attributes {stable_mosaic.version = 11 : i64} {
  func.func @mlp_kernel(%arg0: i32, %arg1: memref<32x128xf32, #tpu.memory_space<vmem>>, %arg2: memref<3x136x128xf32, #tpu.memory_space<vmem>>, %arg3: memref<32x128xf32, #tpu.memory_space<vmem>>) attributes {dimension_semantics = [#tpu.dimension_semantics<parallel>], iteration_bounds = array<i64: 1>, scalar_prefetch = 0 : i64, scratch_operands = 0 : i64, tpu.core_type = #tpu.core_type<tc>, window_params = [{transform_indices = @transform_0, window_bounds = array<i64: 32, 128>}, {pipeline_mode = #tpu.pipeline_mode<synchronous>, transform_indices = @transform_1, window_bounds = array<i64: 3, 136, 128>}, {transform_indices = @transform_2, window_bounds = array<i64: 32, 128>}]} {
    %c0 = arith.constant 0 : index
    %c0_0 = arith.constant 0 : index
    %0 = vector.load %arg1[%c0, %c0_0] : memref<32x128xf32, #tpu.memory_space<vmem>>, vector<32x128xf32>
    %c0_1 = arith.constant 0 : index
    %c0_2 = arith.constant 0 : index
    %c0_3 = arith.constant 0 : index
    %1 = vector.load %arg2[%c0_1, %c0_2, %c0_3] : memref<3x136x128xf32, #tpu.memory_space<vmem>>, vector<1x128x128xf32>
    %2 = vector.shape_cast %1 : vector<1x128x128xf32> to vector<128x128xf32>
    %c0_4 = arith.constant 0 : index
    %c128 = arith.constant 128 : index
    %c0_5 = arith.constant 0 : index
    %3 = vector.load %arg2[%c0_4, %c128, %c0_5] : memref<3x136x128xf32, #tpu.memory_space<vmem>>, vector<1x1x128xf32>
    %4 = vector.shape_cast %3 : vector<1x1x128xf32> to vector<1x128xf32>
    %cst = arith.constant dense<0.000000e+00> : vector<32x128xf32>
    %5 = tpu.matmul %0, %2, %cst {dimension_numbers = #tpu.dot_dimension_numbers<[1], [0], [0], [1], [0, 0, 1, 1], [], []>} : vector<32x128xf32>, vector<128x128xf32>, vector<32x128xf32> -> vector<32x128xf32>
    %6 = vector.broadcast %4 : vector<1x128xf32> to vector<32x128xf32>
    %7 = arith.addf %5, %6 : vector<32x128xf32>
    %cst_6 = arith.constant 0.000000e+00 : f32
    %8 = vector.broadcast %cst_6 : f32 to vector<32x128xf32>
    %9 = arith.maximumf %7, %8 : vector<32x128xf32>
    %c1 = arith.constant 1 : index
    %c0_7 = arith.constant 0 : index
    %c0_8 = arith.constant 0 : index
    %10 = vector.load %arg2[%c1, %c0_7, %c0_8] : memref<3x136x128xf32, #tpu.memory_space<vmem>>, vector<1x128x128xf32>
    %11 = vector.shape_cast %10 : vector<1x128x128xf32> to vector<128x128xf32>
    %c1_9 = arith.constant 1 : index
    %c128_10 = arith.constant 128 : index
    %c0_11 = arith.constant 0 : index
    %12 = vector.load %arg2[%c1_9, %c128_10, %c0_11] : memref<3x136x128xf32, #tpu.memory_space<vmem>>, vector<1x1x128xf32>
    %13 = vector.shape_cast %12 : vector<1x1x128xf32> to vector<1x128xf32>
    %cst_12 = arith.constant dense<0.000000e+00> : vector<32x128xf32>
    %14 = tpu.matmul %9, %11, %cst_12 {dimension_numbers = #tpu.dot_dimension_numbers<[1], [0], [0], [1], [0, 0, 1, 1], [], []>} : vector<32x128xf32>, vector<128x128xf32>, vector<32x128xf32> -> vector<32x128xf32>
    %15 = vector.broadcast %13 : vector<1x128xf32> to vector<32x128xf32>
    %16 = arith.addf %14, %15 : vector<32x128xf32>
    %cst_13 = arith.constant 0.000000e+00 : f32
    %17 = vector.broadcast %cst_13 : f32 to vector<32x128xf32>
    %18 = arith.maximumf %16, %17 : vector<32x128xf32>
    %c2 = arith.constant 2 : index
    %c0_14 = arith.constant 0 : index
    %c0_15 = arith.constant 0 : index
    %19 = vector.load %arg2[%c2, %c0_14, %c0_15] : memref<3x136x128xf32, #tpu.memory_space<vmem>>, vector<1x128x128xf32>
    %20 = vector.shape_cast %19 : vector<1x128x128xf32> to vector<128x128xf32>
    %c2_16 = arith.constant 2 : index
    %c128_17 = arith.constant 128 : index
    %c0_18 = arith.constant 0 : index
    %21 = vector.load %arg2[%c2_16, %c128_17, %c0_18] : memref<3x136x128xf32, #tpu.memory_space<vmem>>, vector<1x1x128xf32>
    %22 = vector.shape_cast %21 : vector<1x1x128xf32> to vector<1x128xf32>
    %cst_19 = arith.constant dense<0.000000e+00> : vector<32x128xf32>
    %23 = tpu.matmul %18, %20, %cst_19 {dimension_numbers = #tpu.dot_dimension_numbers<[1], [0], [0], [1], [0, 0, 1, 1], [], []>} : vector<32x128xf32>, vector<128x128xf32>, vector<32x128xf32> -> vector<32x128xf32>
    %24 = vector.broadcast %22 : vector<1x128xf32> to vector<32x128xf32>
    %25 = arith.addf %23, %24 : vector<32x128xf32>
    %c0_20 = arith.constant 0 : index
    %c0_21 = arith.constant 0 : index
    %26 = vector.load %arg3[%c0_20, %c0_21] : memref<32x128xf32, #tpu.memory_space<vmem>>, vector<32x128xf32>
    tpu.vector_store %arg3[%c0_20, %c0_21], %25 {strides = array<i32>} : memref<32x128xf32, #tpu.memory_space<vmem>>, vector<32x128xf32>,
    return
  }
  func.func @transform_0(%arg0: i32) -> (i32, i32) {
    %c0_i32 = arith.constant 0 : i32
    %c0_i32_0 = arith.constant 0 : i32
    return %arg0, %c0_i32 : i32, i32
  }
  func.func @transform_1(%arg0: i32) -> (i32, i32, i32) {
    %c0_i32 = arith.constant 0 : i32
    %c0_i32_0 = arith.constant 0 : i32
    %c0_i32_1 = arith.constant 0 : i32
    %c0_i32_2 = arith.constant 0 : i32
    return %c0_i32, %c0_i32_0, %c0_i32_1 : i32, i32, i32
  }
  func.func @transform_2(%arg0: i32) -> (i32, i32) {
    %c0_i32 = arith.constant 0 : i32
    %c0_i32_0 = arith.constant 0 : i32
    return %arg0, %c0_i32 : i32, i32
  }
}

</mosaic_0001>

<llo_original>
// kernel: tpu_custom_call.1
$region0: #{tpu_custom_call.1}
  #allocation0 [shape = 'u32[]', space=smem, size = 0x4, offset = 0x4, fixed_abs, tag = 'smem constant byte address 0x4 - core index']
  #allocation1 [shape = 'u32[144,128]{1,0:T(1,128)}', space=vmem, size = 0x12000, scoped, tag = 'internal scratch']
  %s0 = inlined_call_operand.hbm [shape: f32[32,128], index: 0, kind: input, shape index: {}]
  %s1 = inlined_call_operand.hbm [shape: f32[3,136,128], index: 1, kind: input, shape index: {}]
  %s2 = inlined_call_operand.hbm [shape: f32[32,128], index: 2, kind: output, shape index: {}]
  %s3 = sld [smem:[#allocation0]]
  $region26: #{tpu_custom_call.1} parent=0
    _
  %s5 = ssub.s32 1, %s3
  %s6 = scalar_select 0, %s5, %s3
  $region1: #{tpu_custom_call.1} parent=0
    #allocation2 [shape = 'u8[16384]{0}', space=vmem, size = 0x4000, scoped, tag = 'input window, operand 0, single buffered']
    #allocation3 [shape = 's32[1]{0}', space=sflag, size = 0x4, scoped, tag = 'scoped memory for tpu_custom_call.1']
    #allocation4 [shape = 's32[1]{0}', space=sflag, size = 0x4, scoped, tag = 'scoped memory for tpu_custom_call.1']
    #allocation5 [shape = 'u8[208896]{0}', space=vmem, size = 0x33000, scoped, tag = 'input window, operand 1, single buffered']
    #allocation6 [shape = 's32[1]{0}', space=sflag, size = 0x4, scoped, tag = 'scoped memory for tpu_custom_call.1']
    #allocation7 [shape = 'u8[16384]{0}', space=vmem, size = 0x4000, scoped, tag = 'output window, operand 0, single buffered']
    %7 = vsyncpa [#allocation3], 0
    %8 = vsyncpa [#allocation6], 0
    %9 = vsyncpa [#allocation4], 0
    // Predicated region
    $region2: #{tpu_custom_call.1} parent=1 // pred_check
      _
    $region3: #{tpu_custom_call.1} parent=1 // pred_check_branch
      %11 = sbr.rel (0) target = $region5
    $region4: #{tpu_custom_call.1} parent=1 // pred_region
      %s13 = ssub.s32 512, 512
      %14 = vsyncadd [#allocation3], %s13
      %s15 = sshll.u32 [#allocation2], 4
      %s16 = int_to_ptr.vmem [resolvable:$true] %s15
      %21 = dma.hbm_to_vmem [thread:$0]  %s0, 512, %s16, [#allocation3], 128, 128, 8
    $region5: #{tpu_custom_call.1} parent=1 // pred_fallthru
      _
    // Predicated region
    $region6: #{tpu_custom_call.1} parent=1 // pred_check
      _
    $region7: #{tpu_custom_call.1} parent=1 // pred_check_branch
      %23 = sbr.rel (0) target = $region9
    $region8: #{tpu_custom_call.1} parent=1 // pred_region
      %s25 = ssub.s32 6528, 6528
      %26 = vsyncadd [#allocation6], %s25
      %s27 = sshll.u32 [#allocation5], 4
      %s28 = int_to_ptr.vmem [resolvable:$true] %s27
      %33 = dma.hbm_to_vmem [thread:$0]  %s1, 6528, %s28, [#allocation6], 128, 128, 8
    $region9: #{tpu_custom_call.1} parent=1 // pred_fallthru
      _
    // Predicated region
    $region10: #{tpu_custom_call.1} parent=1 // pred_check
      _
    $region11: #{tpu_custom_call.1} parent=1 // pred_check_branch
      %35 = sbr.rel (0) target = $region13
    $region12: #{tpu_custom_call.1} parent=1 // pred_region
      %36 = dma.done [#allocation3], 512
    $region13: #{tpu_custom_call.1} parent=1 // pred_fallthru
      _
    // Predicated region
    $region14: #{tpu_custom_call.1} parent=1 // pred_check
      _
    $region15: #{tpu_custom_call.1} parent=1 // pred_check_branch
      %38 = sbr.rel (0) target = $region17
    $region16: #{tpu_custom_call.1} parent=1 // pred_region
      %39 = dma.done [#allocation6], 6528
    $region17: #{tpu_custom_call.1} parent=1 // pred_fallthru
      _
    %v40 = vld [vmem:[#allocation2] sm:$0xff]
    %v41 = vld [vmem:[#allocation2 + $0x8] sm:$0xff]
    %v42 = vld [vmem:[#allocation2 + $0x10] sm:$0xff]
    %v43 = vld [vmem:[#allocation2 + $0x18] sm:$0xff]
    %v44 = vld [vmem:[#allocation5] sm:$0xff]
    %v45 = vld [vmem:[#allocation5 + $0x8] sm:$0xff]
    %v46 = vld [vmem:[#allocation5 + $0x10] sm:$0xff]
    %v47 = vld [vmem:[#allocation5 + $0x18] sm:$0xff]
    %v48 = vld [vmem:[#allocation5 + $0x20] sm:$0xff]
    %v49 = vld [vmem:[#allocation5 + $0x28] sm:$0xff]
    %v50 = vld [vmem:[#allocation5 + $0x30] sm:$0xff]
    %v51 = vld [vmem:[#allocation5 + $0x38] sm:$0xff]
    %v52 = vld [vmem:[#allocation5 + $0x40] sm:$0xff]
    %v53 = vld [vmem:[#allocation5 + $0x48] sm:$0xff]
    %v54 = vld [vmem:[#allocation5 + $0x50] sm:$0xff]
    %v55 = vld [vmem:[#allocation5 + $0x58] sm:$0xff]
    %v56 = vld [vmem:[#allocation5 + $0x60] sm:$0xff]
    %v57 = vld [vmem:[#allocation5 + $0x68] sm:$0xff]
    %v58 = vld [vmem:[#allocation5 + $0x70] sm:$0xff]
    %v59 = vld [vmem:[#allocation5 + $0x78] sm:$0xff]
    %v60 = vld [vmem:[#allocation5 + $0x80] sm:$0x1]
    %v61 = vlaneseq
    %v62 = vshrl.u32 %v61, 7
    %v63 = vsub.s32 0, %v62
    %v64 = vrot.slane %v60, %v63
    %65 = vmatprep.subr.mxu0 0.0
    %66 = vmatpush1.msra.mxu0 %v44
    %67 = vmatprep.subr.mxu0 0.0
    %68 = vmatpush1.msra.mxu0 %v45
    %69 = vmatprep.subr.mxu0 0.0
    %70 = vmatpush1.msra.mxu0 %v46
    %71 = vmatprep.subr.mxu0 0.0
    %72 = vmatpush1.msra.mxu0 %v47
    %73 = vmatprep.subr.mxu0 0.0
    %74 = vmatpush1.msra.mxu0 %v48
    %75 = vmatprep.subr.mxu0 0.0
    %76 = vmatpush1.msra.mxu0 %v49
    %77 = vmatprep.subr.mxu0 0.0
    %78 = vmatpush1.msra.mxu0 %v50
    %79 = vmatprep.subr.mxu0 0.0
    %80 = vmatpush1.msra.mxu0 %v51
    %81 = vmatprep.subr.mxu0 0.0
    %82 = vmatpush1.msra.mxu0 %v52
    %83 = vmatprep.subr.mxu0 0.0
    %84 = vmatpush1.msra.mxu0 %v53
    %85 = vmatprep.subr.mxu0 0.0
    %86 = vmatpush1.msra.mxu0 %v54
    %87 = vmatprep.subr.mxu0 0.0
    %88 = vmatpush1.msra.mxu0 %v55
    %89 = vmatprep.subr.mxu0 0.0
    %90 = vmatpush1.msra.mxu0 %v56
    %91 = vmatprep.subr.mxu0 0.0
    %92 = vmatpush1.msra.mxu0 %v57
    %93 = vmatprep.subr.mxu0 0.0
    %94 = vmatpush1.msra.mxu0 %v58
    %95 = vmatprep.subr.mxu0 0.0
    %96 = vmatpush1.msra.mxu0 %v59
    %97 = vmatprep.subr.mxu0 0.0
    %98 = vmatpush1.msra.mxu0 0.0
    %99 = vmatprep.subr.mxu0 0.0
    %100 = vmatpush1.msra.mxu0 0.0
    %101 = vmatprep.subr.mxu0 0.0
    %102 = vmatpush1.msra.mxu0 0.0
    %103 = vmatprep.subr.mxu0 0.0
    %104 = vmatpush1.msra.mxu0 0.0
    %105 = vmatprep.subr.mxu0 0.0
    %106 = vmatpush1.msra.mxu0 0.0
    %107 = vmatprep.subr.mxu0 0.0
    %108 = vmatpush1.msra.mxu0 0.0
    %109 = vmatprep.subr.mxu0 0.0
    %110 = vmatpush1.msra.mxu0 0.0
    %111 = vmatprep.subr.mxu0 0.0
    %112 = vmatpush1.msra.mxu0 0.0
    %113 = vmatprep.subr.mxu0 0.0
    %114 = vmatpush1.msra.mxu0 0.0
    %115 = vmatprep.subr.mxu0 0.0
    %116 = vmatpush1.msra.mxu0 0.0
    %117 = vmatprep.subr.mxu0 0.0
    %118 = vmatpush1.msra.mxu0 0.0
    %119 = vmatprep.subr.mxu0 0.0
    %120 = vmatpush1.msra.mxu0 0.0
    %121 = vmatprep.subr.mxu0 0.0
    %122 = vmatpush1.msra.mxu0 0.0
    %123 = vmatprep.subr.mxu0 0.0
    %124 = vmatpush1.msra.mxu0 0.0
    %125 = vmatprep.subr.mxu0 0.0
    %126 = vmatpush1.msra.mxu0 0.0
    %127 = vmatprep.subr.mxu0 0.0
    %128 = vmatpush1.msra.mxu0 0.0
    %129 = vmatprep.mubr.f32.mxu0 0.0
    %130 = vmatmul.mubr.f32.gmra.mrb[0].mxu0 %v40
    %v131 = vpop.f32.mrb[0].mxu0
    %v132 = vadd.f32 %v64, %v131
    %v133 = vpop.f32.mrb[0].mxu0
    %134 = vmatprep.mubr.f32.mxu0 0.0
    %135 = vmatmul.mubr.f32.gmra.mrb[0].mxu0 %v41
    %v136 = vpop.f32.mrb[0].mxu0
    %v137 = vadd.f32 %v64, %v136
    %v138 = vpop.f32.mrb[0].mxu0
    %139 = vmatprep.mubr.f32.mxu0 0.0
    %140 = vmatmul.mubr.f32.gmra.mrb[0].mxu0 %v42
    %v141 = vpop.f32.mrb[0].mxu0
    %v142 = vadd.f32 %v64, %v141
    %v143 = vpop.f32.mrb[0].mxu0
    %144 = vmatprep.mubr.f32.mxu0 0.0
    %145 = vmatmul.mubr.f32.gmra.mrb[0].mxu0 %v43
    %v146 = vpop.f32.mrb[0].mxu0
    %v147 = vadd.f32 %v64, %v146
    %v148 = vpop.f32.mrb[0].mxu0
    %149 = vdwg.mxu0
    %v150 = vmax.f32 %v132, 0.0
    %v151 = vmax.f32 %v137, 0.0
    %v152 = vmax.f32 %v142, 0.0
    %v153 = vmax.f32 %v147, 0.0
    %s154 = scalar_lea.vmem [#allocation5], 136
    %v155 = vld [vmem:[%s154] sm:$0xff]
    %v156 = vld [vmem:[%s154 + $0x8] sm:$0xff]
    %v157 = vld [vmem:[%s154 + $0x10] sm:$0xff]
    %v158 = vld [vmem:[%s154 + $0x18] sm:$0xff]
    %v159 = vld [vmem:[%s154 + $0x20] sm:$0xff]
    %v160 = vld [vmem:[%s154 + $0x28] sm:$0xff]
    %v161 = vld [vmem:[%s154 + $0x30] sm:$0xff]
    %v162 = vld [vmem:[%s154 + $0x38] sm:$0xff]
    %v163 = vld [vmem:[%s154 + $0x40] sm:$0xff]
    %v164 = vld [vmem:[%s154 + $0x48] sm:$0xff]
    %v165 = vld [vmem:[%s154 + $0x50] sm:$0xff]
    %v166 = vld [vmem:[%s154 + $0x58] sm:$0xff]
    %v167 = vld [vmem:[%s154 + $0x60] sm:$0xff]
    %v168 = vld [vmem:[%s154 + $0x68] sm:$0xff]
    %v169 = vld [vmem:[%s154 + $0x70] sm:$0xff]
    %v170 = vld [vmem:[%s154 + $0x78] sm:$0xff]
    %v171 = vld [vmem:[%s154 + $0x80] sm:$0x1]
    %v172 = vlaneseq
    %v173 = vshrl.u32 %v172, 7
    %v174 = vsub.s32 0, %v173
    %v175 = vrot.slane %v171, %v174
    %176 = vmatprep.subr.mxu0 0.0
    %177 = vmatpush1.msra.mxu0 %v155
    %178 = vmatprep.subr.mxu0 0.0
    %179 = vmatpush1.msra.mxu0 %v156
    %180 = vmatprep.subr.mxu0 0.0
    %181 = vmatpush1.msra.mxu0 %v157
    %182 = vmatprep.subr.mxu0 0.0
    %183 = vmatpush1.msra.mxu0 %v158
    %184 = vmatprep.subr.mxu0 0.0
    %185 = vmatpush1.msra.mxu0 %v159
    %186 = vmatprep.subr.mxu0 0.0
    %187 = vmatpush1.msra.mxu0 %v160
    %188 = vmatprep.subr.mxu0 0.0
    %189 = vmatpush1.msra.mxu0 %v161
    %190 = vmatprep.subr.mxu0 0.0
    %191 = vmatpush1.msra.mxu0 %v162
    %192 = vmatprep.subr.mxu0 0.0
    %193 = vmatpush1.msra.mxu0 %v163
    %194 = vmatprep.subr.mxu0 0.0
    %195 = vmatpush1.msra.mxu0 %v164
    %196 = vmatprep.subr.mxu0 0.0
    %197 = vmatpush1.msra.mxu0 %v165
    %198 = vmatprep.subr.mxu0 0.0
    %199 = vmatpush1.msra.mxu0 %v166
    %200 = vmatprep.subr.mxu0 0.0
    %201 = vmatpush1.msra.mxu0 %v167
    %202 = vmatprep.subr.mxu0 0.0
    %203 = vmatpush1.msra.mxu0 %v168
    %204 = vmatprep.subr.mxu0 0.0
    %205 = vmatpush1.msra.mxu0 %v169
    %206 = vmatprep.subr.mxu0 0.0
    %207 = vmatpush1.msra.mxu0 %v170
    %208 = vmatprep.subr.mxu0 0.0
    %209 = vmatpush1.msra.mxu0 0.0
    %210 = vmatprep.subr.mxu0 0.0
    %211 = vmatpush1.msra.mxu0 0.0
    %212 = vmatprep.subr.mxu0 0.0
    %213 = vmatpush1.msra.mxu0 0.0
    %214 = vmatprep.subr.mxu0 0.0
    %215 = vmatpush1.msra.mxu0 0.0
    %216 = vmatprep.subr.mxu0 0.0
    %217 = vmatpush1.msra.mxu0 0.0
    %218 = vmatprep.subr.mxu0 0.0
    %219 = vmatpush1.msra.mxu0 0.0
    %220 = vmatprep.subr.mxu0 0.0
    %221 = vmatpush1.msra.mxu0 0.0
    %222 = vmatprep.subr.mxu0 0.0
    %223 = vmatpush1.msra.mxu0 0.0
    %224 = vmatprep.subr.mxu0 0.0
    %225 = vmatpush1.msra.mxu0 0.0
    %226 = vmatprep.subr.mxu0 0.0
    %227 = vmatpush1.msra.mxu0 0.0
    %228 = vmatprep.subr.mxu0 0.0
    %229 = vmatpush1.msra.mxu0 0.0
    %230 = vmatprep.subr.mxu0 0.0
    %231 = vmatpush1.msra.mxu0 0.0
    %232 = vmatprep.subr.mxu0 0.0
    %233 = vmatpush1.msra.mxu0 0.0
    %234 = vmatprep.subr.mxu0 0.0
    %235 = vmatpush1.msra.mxu0 0.0
    %236 = vmatprep.subr.mxu0 0.0
    %237 = vmatpush1.msra.mxu0 0.0
    %238 = vmatprep.subr.mxu0 0.0
    %239 = vmatpush1.msra.mxu0 0.0
    %240 = vmatprep.mubr.f32.mxu0 0.0
    %241 = vmatmul.mubr.f32.gmra.mrb[0].mxu0 %v150
    %v242 = vpop.f32.mrb[0].mxu0
    %v243 = vadd.f32 %v175, %v242
    %v244 = vpop.f32.mrb[0].mxu0
    %245 = vmatprep.mubr.f32.mxu0 0.0
    %246 = vmatmul.mubr.f32.gmra.mrb[0].mxu0 %v151
    %v247 = vpop.f32.mrb[0].mxu0
    %v248 = vadd.f32 %v175, %v247
    %v249 = vpop.f32.mrb[0].mxu0
    %250 = vmatprep.mubr.f32.mxu0 0.0
    %251 = vmatmul.mubr.f32.gmra.mrb[0].mxu0 %v152
    %v252 = vpop.f32.mrb[0].mxu0
    %v253 = vadd.f32 %v175, %v252
    %v254 = vpop.f32.mrb[0].mxu0
    %255 = vmatprep.mubr.f32.mxu0 0.0
    %256 = vmatmul.mubr.f32.gmra.mrb[0].mxu0 %v153
    %v257 = vpop.f32.mrb[0].mxu0
    %v258 = vadd.f32 %v175, %v257
    %v259 = vpop.f32.mrb[0].mxu0
    %260 = vdwg.mxu0
    %v261 = vmax.f32 %v243, 0.0
    %v262 = vmax.f32 %v248, 0.0
    %v263 = vmax.f32 %v253, 0.0
    %v264 = vmax.f32 %v258, 0.0
    %s265 = scalar_lea.vmem [#allocation5], 272
    %v266 = vld [vmem:[%s265] sm:$0xff]
    %v267 = vld [vmem:[%s265 + $0x8] sm:$0xff]
    %v268 = vld [vmem:[%s265 + $0x10] sm:$0xff]
    %v269 = vld [vmem:[%s265 + $0x18] sm:$0xff]
    %v270 = vld [vmem:[%s265 + $0x20] sm:$0xff]
    %v271 = vld [vmem:[%s265 + $0x28] sm:$0xff]
    %v272 = vld [vmem:[%s265 + $0x30] sm:$0xff]
    %v273 = vld [vmem:[%s265 + $0x38] sm:$0xff]
    %v274 = vld [vmem:[%s265 + $0x40] sm:$0xff]
    %v275 = vld [vmem:[%s265 + $0x48] sm:$0xff]
    %v276 = vld [vmem:[%s265 + $0x50] sm:$0xff]
    %v277 = vld [vmem:[%s265 + $0x58] sm:$0xff]
    %v278 = vld [vmem:[%s265 + $0x60] sm:$0xff]
    %v279 = vld [vmem:[%s265 + $0x68] sm:$0xff]
    %v280 = vld [vmem:[%s265 + $0x70] sm:$0xff]
    %v281 = vld [vmem:[%s265 + $0x78] sm:$0xff]
    %v282 = vld [vmem:[%s265 + $0x80] sm:$0x1]
    %v283 = vlaneseq
    %v284 = vshrl.u32 %v283, 7
    %v285 = vsub.s32 0, %v284
    %v286 = vrot.slane %v282, %v285
    %287 = vmatprep.subr.mxu0 0.0
    %288 = vmatpush1.msra.mxu0 %v266
    %289 = vmatprep.subr.mxu0 0.0
    %290 = vmatpush1.msra.mxu0 %v267
    %291 = vmatprep.subr.mxu0 0.0
    %292 = vmatpush1.msra.mxu0 %v268
    %293 = vmatprep.subr.mxu0 0.0
    %294 = vmatpush1.msra.mxu0 %v269
    %295 = vmatprep.subr.mxu0 0.0
    %296 = vmatpush1.msra.mxu0 %v270
    %297 = vmatprep.subr.mxu0 0.0
    %298 = vmatpush1.msra.mxu0 %v271
    %299 = vmatprep.subr.mxu0 0.0
    %300 = vmatpush1.msra.mxu0 %v272
    %301 = vmatprep.subr.mxu0 0.0
    %302 = vmatpush1.msra.mxu0 %v273
    %303 = vmatprep.subr.mxu0 0.0
    %304 = vmatpush1.msra.mxu0 %v274
    %305 = vmatprep.subr.mxu0 0.0
    %306 = vmatpush1.msra.mxu0 %v275
    %307 = vmatprep.subr.mxu0 0.0
    %308 = vmatpush1.msra.mxu0 %v276
    %309 = vmatprep.subr.mxu0 0.0
    %310 = vmatpush1.msra.mxu0 %v277
    %311 = vmatprep.subr.mxu0 0.0
    %312 = vmatpush1.msra.mxu0 %v278
    %313 = vmatprep.subr.mxu0 0.0
    %314 = vmatpush1.msra.mxu0 %v279
    %315 = vmatprep.subr.mxu0 0.0
    %316 = vmatpush1.msra.mxu0 %v280
    %317 = vmatprep.subr.mxu0 0.0
    %318 = vmatpush1.msra.mxu0 %v281
    %319 = vmatprep.subr.mxu0 0.0
    %320 = vmatpush1.msra.mxu0 0.0
    %321 = vmatprep.subr.mxu0 0.0
    %322 = vmatpush1.msra.mxu0 0.0
    %323 = vmatprep.subr.mxu0 0.0
    %324 = vmatpush1.msra.mxu0 0.0
    %325 = vmatprep.subr.mxu0 0.0
    %326 = vmatpush1.msra.mxu0 0.0
    %327 = vmatprep.subr.mxu0 0.0
    %328 = vmatpush1.msra.mxu0 0.0
    %329 = vmatprep.subr.mxu0 0.0
    %330 = vmatpush1.msra.mxu0 0.0
    %331 = vmatprep.subr.mxu0 0.0
    %332 = vmatpush1.msra.mxu0 0.0
    %333 = vmatprep.subr.mxu0 0.0
    %334 = vmatpush1.msra.mxu0 0.0
    %335 = vmatprep.subr.mxu0 0.0
    %336 = vmatpush1.msra.mxu0 0.0
    %337 = vmatprep.subr.mxu0 0.0
    %338 = vmatpush1.msra.mxu0 0.0
    %339 = vmatprep.subr.mxu0 0.0
    %340 = vmatpush1.msra.mxu0 0.0
    %341 = vmatprep.subr.mxu0 0.0
    %342 = vmatpush1.msra.mxu0 0.0
    %343 = vmatprep.subr.mxu0 0.0
    %344 = vmatpush1.msra.mxu0 0.0
    %345 = vmatprep.subr.mxu0 0.0
    %346 = vmatpush1.msra.mxu0 0.0
    %347 = vmatprep.subr.mxu0 0.0
    %348 = vmatpush1.msra.mxu0 0.0
    %349 = vmatprep.subr.mxu0 0.0
    %350 = vmatpush1.msra.mxu0 0.0
    %351 = vmatprep.mubr.f32.mxu0 0.0
    %352 = vmatmul.mubr.f32.gmra.mrb[0].mxu0 %v261
    %v353 = vpop.f32.mrb[0].mxu0
    %v354 = vadd.f32 %v286, %v353
    %v355 = vpop.f32.mrb[0].mxu0
    %356 = vmatprep.mubr.f32.mxu0 0.0
    %357 = vmatmul.mubr.f32.gmra.mrb[0].mxu0 %v262
    %v358 = vpop.f32.mrb[0].mxu0
    %v359 = vadd.f32 %v286, %v358
    %v360 = vpop.f32.mrb[0].mxu0
    %361 = vmatprep.mubr.f32.mxu0 0.0
    %362 = vmatmul.mubr.f32.gmra.mrb[0].mxu0 %v263
    %v363 = vpop.f32.mrb[0].mxu0
    %v364 = vadd.f32 %v286, %v363
    %v365 = vpop.f32.mrb[0].mxu0
    %366 = vmatprep.mubr.f32.mxu0 0.0
    %367 = vmatmul.mubr.f32.gmra.mrb[0].mxu0 %v264
    %v368 = vpop.f32.mrb[0].mxu0
    %v369 = vadd.f32 %v286, %v368
    %v370 = vpop.f32.mrb[0].mxu0
    %371 = vdwg.mxu0
    %372 = vst [vmem:[#allocation7] sm:$0xff] %v354
    %373 = vst [vmem:[#allocation7 + $0x8] sm:$0xff] %v359
    %374 = vst [vmem:[#allocation7 + $0x10] sm:$0xff] %v364
    %375 = vst [vmem:[#allocation7 + $0x18] sm:$0xff] %v369
    // Predicated region
    $region18: #{tpu_custom_call.1} parent=1 // pred_check
      _
    $region19: #{tpu_custom_call.1} parent=1 // pred_check_branch
      %377 = sbr.rel (0) target = $region21
    $region20: #{tpu_custom_call.1} parent=1 // pred_region
      %s379 = ssub.s32 512, 512
      %380 = vsyncadd [#allocation4], %s379
      %s381 = sshll.u32 [#allocation7], 4
      %s382 = int_to_ptr.vmem [resolvable:$true] %s381
      %387 = dma.vmem_to_hbm [thread:$0]  %s382, 512, %s2, [#allocation4], 128, 128, 8
    $region21: #{tpu_custom_call.1} parent=1 // pred_fallthru
      _
    // Predicated region
    $region22: #{tpu_custom_call.1} parent=1 // pred_check
      _
    $region23: #{tpu_custom_call.1} parent=1 // pred_check_branch
      %389 = sbr.rel (0) target = $region25
    $region24: #{tpu_custom_call.1} parent=1 // pred_region
      %390 = dma.done [#allocation4], 512
    $region25: #{tpu_custom_call.1} parent=1 // pred_fallthru
      _
    %391 = vsyncpa [#allocation3], 1
    %392 = vsyncpa [#allocation6], 1
    %393 = vsyncpa [#allocation4], 1

</llo_original>
